<compile_context>
chip_gen: v7x
topology: tpu7x:2x2x1
jax: 0.10.0
libtpu: 0.0.40
codegen_flags: <defaults>
</compile_context>

<pallas_src>
import functools

import jax
import jax.numpy as jnp
from jax.experimental import pallas as pl
from jax.experimental.pallas import tpu as pltpu

NEG_SLOPE = 0.2       # DGL GATConv default negative_slope
MASK_NEG = -1e30      # additive mask for non-edges in the softmax logits


# ----------------------------------------------------------------------------
# Tiling / hardware helpers
# ----------------------------------------------------------------------------
def _round_up(n, m):
    return ((n + m - 1) // m) * m


def _vmem_capacity_bytes():
    try:
        return int(pltpu.get_tpu_info().vmem_capacity_bytes)
    except Exception:
        return 64 * 1024 * 1024          # conservative default (v7x per-core VMEM)


def _choose_tiling(n):
    """Pick the dst-row tile TM so the pipelined footprint fits this chip's VMEM
    (v7x: 64 MiB, v5e/v6e: 128 MiB)."""
    cap = _vmem_capacity_bytes()
    np_ = _round_up(n, 128)
    resident = 2 * np_ * 128 * 2 + (2 << 20)               # resident feat / xW_neigh slabs + weights
    budget = int(cap * 0.55)
    tm = 128
    for cand in (512, 256, 128):
        if np_ % cand:
            continue
        per_step = 2 * cand * (2 * np_ + 6 * 128 * 4)      # double-buffered bf16 A tile + small tiles
        if resident + per_step <= budget:
            tm = cand
            break
    vmem_limit = int(cap * 0.75)
    return np_, tm, vmem_limit


def _compiler_params(vmem_limit):
    return pltpu.CompilerParams(dimension_semantics=("parallel",),
                                vmem_limit_bytes=vmem_limit)


def _elu(x):
    # overflow-safe ELU (exp only evaluated on the <= 0 branch)
    return jnp.where(x > 0, x, jnp.exp(jnp.minimum(x, 0.0)) - 1.0)


# ----------------------------------------------------------------------------
# Kernels
# ----------------------------------------------------------------------------
def project_kernel(x_ref, w_ref, o_ref):
    """o = x @ w (bf16 MXU, f32 accumulation), tiled over rows; W stays resident."""
    o_ref[...] = jnp.dot(x_ref[...], w_ref[...],
                         preferred_element_type=jnp.float32).astype(o_ref.dtype)


def sage_agg_kernel(x_ref, a_ref, xwn_ref, ws_ref, b_ref, o_ref, *, d_true):
    """Fused DGL SAGEConv('mean') + ELU for one tile of destination rows.

    xwn_ref holds [x @ W_neigh | 1], so a single MXU pass over A gives both the neighbour
    feature sum and the in-degree (column d_true) -- no XLU row reduction needed."""
    agg = jnp.dot(a_ref[...], xwn_ref[...], preferred_element_type=jnp.float32)   # (TM, Dp)
    deg = agg[:, d_true:d_true + 1]
    inv_deg = pl.reciprocal(jnp.maximum(deg, 1.0), approx=True)                   # EUP slot
    self_p = jnp.dot(x_ref[...], ws_ref[...], preferred_element_type=jnp.float32)
    pre = self_p + b_ref[...] + agg * inv_deg
    out = _elu(pre)
    lane = jax.lax.broadcasted_iota(jnp.int32, out.shape, 1)
    o_ref[...] = jnp.where(lane < d_true, out, 0.0)         # keep padded columns exactly zero


def gat_project_kernel(h_ref, w_ref, alr_ref, feat_ref, sc_ref):
    """Per-node GAT projection: feat = h @ W, plus all heads' attention scores in one
    block-diagonal matmul: sc[:, h] = <feat_h, attn_l[h]>, sc[:, H+h] = <feat_h, attn_r[h]>."""
    feat = jnp.dot(h_ref[...], w_ref[...], preferred_element_type=jnp.float32)
    fb = feat.astype(jnp.bfloat16)
    feat_ref[...] = fb
    sc_ref[...] = jnp.dot(fb, alr_ref[...], preferred_element_type=jnp.float32)


def gat_attend_kernel(a_ref, feat_ref, sc_ref, elt_ref, hmask_ref, b_ref, o_ref,
                      *, n_heads, apply_elu):
    """Dense masked edge-softmax GAT aggregation for one tile of destination rows.

    Mask handling is hoisted out of the head loop, normalization is deferred to the
    (TM, H*D) result, and the output is written once as a lane-dense slab."""
    a = a_ref[...]                                   # (TM, Np) bf16 0/1
    e_bias = jnp.where(a > 0, 0.0, MASK_NEG)         # hoisted: one (TM, Np) select total
    feat = feat_ref[...]                             # (Np, HDp) bf16
    sc = sc_ref[...]                                 # (TM, 128) f32, er at cols [H, 2H)
    elt = elt_ref[...]                               # (H, Np)  f32 source scores (pre-transposed)
    acc = jnp.zeros(o_ref.shape, jnp.float32)
    for h in range(n_heads):
        er = sc[:, n_heads + h:n_heads + h + 1]      # (TM, 1) destination score
        el = elt[h:h + 1, :]                         # (1, Np) source score
        e = er + el
        e = jnp.where(e > 0, e, NEG_SLOPE * e) + e_bias          # LeakyReLU + mask bias
        m = jnp.max(e, axis=1, keepdims=True)
        p = jnp.exp(e - m)                                       # masked entries underflow to 0
        denom = jnp.sum(p, axis=1, keepdims=True)
        unnorm = jnp.dot(p.astype(jnp.bfloat16), feat,
                         preferred_element_type=jnp.float32)     # (TM, HDp) MXU
        # deferred softmax normalization; zero-in-degree rows (m stuck at MASK_NEG) give 0
        scale = jnp.where(m > 0.5 * MASK_NEG,
                          pl.reciprocal(denom, approx=True), 0.0)
        acc = acc + unnorm * scale * hmask_ref[h:h + 1, :]
    out = acc + b_ref[...]
    if apply_elu:
        out = _elu(out)
    o_ref[...] = out                                  # single lane-dense store


# ----------------------------------------------------------------------------
# Layer wrappers (padding + BlockSpec plumbing)
# ----------------------------------------------------------------------------
def sage_layer(h_pad, a_pad, w_self, w_neigh, b, *, tm, vmem_limit):
    np_, fp = h_pad.shape
    f_true, d_true = w_self.shape
    dp = _round_up(d_true + 1, 128)                  # extra column carries the in-degree

    wn_aug = (jnp.zeros((fp, dp), jnp.float32)
              .at[:f_true, :d_true].set(w_neigh)
              .at[f_true, d_true].set(1.0)).astype(jnp.bfloat16)   # ones col of x -> degree col
    ws_pad = (jnp.zeros((fp, dp), jnp.float32)
              .at[:f_true, :d_true].set(w_self)).astype(jnp.bfloat16)
    b_pad = jnp.zeros((1, dp), jnp.float32).at[:, :d_true].set(b.reshape(1, -1))

    grid = (np_ // tm,)
    cp = _compiler_params(vmem_limit)

    # pass 1: project-then-aggregate -> xw_neigh = [x | 1] @ [W_neigh | e]
    xw_neigh = pl.pallas_call(
        project_kernel,
        out_shape=jax.ShapeDtypeStruct((np_, dp), jnp.bfloat16),
        grid=grid,
        in_specs=[pl.BlockSpec((tm, fp), lambda i: (i, 0)),
                  pl.BlockSpec((fp, dp), lambda i: (0, 0))],
        out_specs=pl.BlockSpec((tm, dp), lambda i: (i, 0)),
        compiler_params=cp,
    )(h_pad, wn_aug)

    # pass 2: tiled aggregation over destination rows
    out = pl.pallas_call(
        functools.partial(sage_agg_kernel, d_true=d_true),
        out_shape=jax.ShapeDtypeStruct((np_, dp), jnp.float32),
        grid=grid,
        in_specs=[pl.BlockSpec((tm, fp), lambda i: (i, 0)),    # x (dst tile)
                  pl.BlockSpec((tm, np_), lambda i: (i, 0)),   # A (dst tile, full src width)
                  pl.BlockSpec((np_, dp), lambda i: (0, 0)),   # [x@W_neigh | 1] (resident)
                  pl.BlockSpec((fp, dp), lambda i: (0, 0)),    # W_self (resident)
                  pl.BlockSpec((1, dp), lambda i: (0, 0))],    # bias
        out_specs=pl.BlockSpec((tm, dp), lambda i: (i, 0)),
        compiler_params=cp,
    )(h_pad, a_pad, xw_neigh, ws_pad, b_pad)
    return out, d_true


def gat_layer(h_pad, a_pad, w, attn_l, attn_r, bias, *, n_heads, d_out,
              apply_elu, tm, vmem_limit):
    np_, fp = h_pad.shape
    in_true = w.shape[0]
    hd = n_heads * d_out
    hdp = _round_up(hd, 128)
    sp = 128                                         # score columns (>= 2 * n_heads)

    w_pad = (jnp.zeros((fp, hdp), jnp.float32)
             .at[:in_true, :hd].set(w)).astype(jnp.bfloat16)
    alr = jnp.zeros((hdp, sp), jnp.float32)          # block-diag [attn_l | attn_r]
    hmask = jnp.zeros((n_heads, hdp), jnp.float32)   # per-head output-column masks
    for h in range(n_heads):
        lo = h * d_out
        alr = alr.at[lo:lo + d_out, h].set(attn_l[h])
        alr = alr.at[lo:lo + d_out, n_heads + h].set(attn_r[h])
        hmask = hmask.at[h, lo:lo + d_out].set(1.0)
    alr = alr.astype(jnp.bfloat16)
    b_pad = jnp.zeros((1, hdp), jnp.float32).at[:, :hd].set(bias.reshape(1, -1))

    grid = (np_ // tm,)
    cp = _compiler_params(vmem_limit)

    feat, scores = pl.pallas_call(
        gat_project_kernel,
        out_shape=(jax.ShapeDtypeStruct((np_, hdp), jnp.bfloat16),
                   jax.ShapeDtypeStruct((np_, sp), jnp.float32)),
        grid=grid,
        in_specs=[pl.BlockSpec((tm, fp), lambda i: (i, 0)),
                  pl.BlockSpec((fp, hdp), lambda i: (0, 0)),
                  pl.BlockSpec((hdp, sp), lambda i: (0, 0))],
        out_specs=(pl.BlockSpec((tm, hdp), lambda i: (i, 0)),
                   pl.BlockSpec((tm, sp), lambda i: (i, 0))),
        compiler_params=cp,
    )(h_pad, w_pad, alr)

    # source scores transposed once to a lane-indexed row (wrapper-side layout plumbing)
    elt = jnp.transpose(scores[:, :n_heads])         # (H, Np)

    out = pl.pallas_call(
        functools.partial(gat_attend_kernel, n_heads=n_heads, apply_elu=apply_elu),
        out_shape=jax.ShapeDtypeStruct((np_, hdp), jnp.float32),
        grid=grid,
        in_specs=[pl.BlockSpec((tm, np_), lambda i: (i, 0)),       # A (dst tile)
                  pl.BlockSpec((np_, hdp), lambda i: (0, 0)),      # feat (resident)
                  pl.BlockSpec((tm, sp), lambda i: (i, 0)),        # scores (dst tile -> er)
                  pl.BlockSpec((n_heads, np_), lambda i: (0, 0)),  # el^T (resident)
                  pl.BlockSpec((n_heads, hdp), lambda i: (0, 0)),  # head column masks
                  pl.BlockSpec((1, hdp), lambda i: (0, 0))],       # bias
        out_specs=pl.BlockSpec((tm, hdp), lambda i: (i, 0)),
        compiler_params=cp,
    )(a_pad, feat, scores, elt, hmask, b_pad)
    return out, hd


# ----------------------------------------------------------------------------
# Model forward (mirrors DistGAT.forward)
# ----------------------------------------------------------------------------
def dist_gat_forward(blocks, x, params, n_heads):
    n_layers = len(n_heads)
    n, in_feats = x.shape
    np_, tm, vmem_limit = _choose_tiling(n)

    a_pads = [jnp.zeros((np_, np_), jnp.float32).at[:n, :n].set(a).astype(jnp.bfloat16)
              for a in blocks]

    fp0 = _round_up(in_feats + 1, 128)
    h = (jnp.zeros((np_, fp0), jnp.float32)
         .at[:n, :in_feats].set(x)
         .at[:, in_feats].set(1.0)           # ones column -> in-degree via the MXU
         ).astype(jnp.bfloat16)

    for i in range(n_layers):
        last = i == n_layers - 1
        if i == 0:
            w_self, w_neigh, b = params[0]
            hf, d_true = sage_layer(h, a_pads[0], w_self, w_neigh, b,
                                    tm=tm, vmem_limit=vmem_limit)   # ELU fused in kernel
        else:
            w, al, ar, bias = params[i]
            d_out = al.shape[1]
            hf, d_true = gat_layer(h, a_pads[i], w, al, ar, bias,
                                   n_heads=n_heads[i], d_out=d_out,
                                   apply_elu=not last, tm=tm, vmem_limit=vmem_limit)
        if last:
            d_out = d_true // n_heads[i]
            # h.mean(1) over the heads axis (heads[-1] == 1), plus un-padding
            return hf[:n, :d_true].reshape(n, n_heads[i], d_out).mean(axis=1)
        h = hf.astype(jnp.bfloat16)           # next layer consumes padded bf16 activations
    return None


# ----------------------------------------------------------------------------
# Deterministic parameter / input construction
# ----------------------------------------------------------------------------
def make_params(key, in_feats, n_hidden, n_classes, n_heads):
    n_layers = len(n_heads)
    params = []
    for i in range(n_layers):
        in_dim = in_feats if i == 0 else n_hidden * n_heads[i - 1]
        out_dim = n_classes if i == n_layers - 1 else n_hidden
        if i == 0:
            key, k1, k2, k3 = jax.random.split(key, 4)
            total = out_dim * n_heads[0]
            params.append((
                0.1 * jax.random.normal(k1, (in_dim, total), jnp.float32),   # W_self
                0.1 * jax.random.normal(k2, (in_dim, total), jnp.float32),   # W_neigh
                0.1 * jax.random.normal(k3, (1, total), jnp.float32),        # bias
            ))
        else:
            key, k1, k2, k3, k4 = jax.random.split(key, 5)
            hth = n_heads[i]
            params.append((
                0.1 * jax.random.normal(k1, (in_dim, hth * out_dim), jnp.float32),  # W (fc)
                0.1 * jax.random.normal(k2, (hth, out_dim), jnp.float32),           # attn_l
                0.1 * jax.random.normal(k3, (hth, out_dim), jnp.float32),           # attn_r
                0.1 * jax.random.normal(k4, (hth, out_dim), jnp.float32),           # bias
            ))
    return params


def make_adj(key, n, p=0.3):
    return (jax.random.uniform(key, (n, n)) < p).astype(jnp.float32)


if __name__ == "__main__":
    N = 16
    IN_FEATS = 32
    N_HIDDEN = 16
    N_CLASSES = 8
    N_HEADS = [2, 2, 1]          # n_layers = 3, last head count must be 1

    root = jax.random.PRNGKey(0)
    kx, kp, ka0, ka1, ka2 = jax.random.split(root, 5)

    x = jax.random.normal(kx, (N, IN_FEATS), jnp.float32)
    blocks = [make_adj(ka0, N), make_adj(ka1, N), make_adj(ka2, N)]
    params = make_params(kp, IN_FEATS, N_HIDDEN, N_CLASSES, N_HEADS)

    out = dist_gat_forward(blocks, x, params, N_HEADS)
    out = jax.block_until_ready(out)
    assert out.shape == (N, N_CLASSES), out.shape
    assert bool(jnp.all(jnp.isfinite(out)))
    print("KERNEL_OK")
</pallas_src>

<mosaic_0001>
module attributes {stable_mosaic.version = 11 : i64} {
  func.func @project_kernel(%arg0: i32, %arg1: memref<128x128xbf16, #tpu.memory_space<vmem>>, %arg2: memref<128x128xbf16, #tpu.memory_space<vmem>>, %arg3: memref<128x128xbf16, #tpu.memory_space<vmem>>) attributes {dimension_semantics = [#tpu.dimension_semantics<parallel>], iteration_bounds = array<i64: 1>, scalar_prefetch = 0 : i64, scratch_operands = 0 : i64, tpu.core_type = #tpu.core_type<tc>, window_params = [{transform_indices = @transform_0, window_bounds = array<i64: 128, 128>}, {pipeline_mode = #tpu.pipeline_mode<synchronous>, transform_indices = @transform_1, window_bounds = array<i64: 128, 128>}, {transform_indices = @transform_2, window_bounds = array<i64: 128, 128>}]} {
    %c0 = arith.constant 0 : index
    %c0_0 = arith.constant 0 : index
    %0 = vector.load %arg1[%c0, %c0_0] : memref<128x128xbf16, #tpu.memory_space<vmem>>, vector<128x128xbf16>
    %c0_1 = arith.constant 0 : index
    %c0_2 = arith.constant 0 : index
    %1 = vector.load %arg2[%c0_1, %c0_2] : memref<128x128xbf16, #tpu.memory_space<vmem>>, vector<128x128xbf16>
    %cst = arith.constant dense<0.000000e+00> : vector<128x128xf32>
    %2 = tpu.matmul %0, %1, %cst {dimension_numbers = #tpu.dot_dimension_numbers<[1], [0], [0], [1], [0, 0, 1, 1], [], []>} : vector<128x128xbf16>, vector<128x128xbf16>, vector<128x128xf32> -> vector<128x128xf32>
    %3 = arith.truncf %2 : vector<128x128xf32> to vector<128x128xbf16>
    %c0_3 = arith.constant 0 : index
    %c0_4 = arith.constant 0 : index
    %4 = vector.load %arg3[%c0_3, %c0_4] : memref<128x128xbf16, #tpu.memory_space<vmem>>, vector<128x128xbf16>
    tpu.vector_store %arg3[%c0_3, %c0_4], %3 {strides = array<i32>} : memref<128x128xbf16, #tpu.memory_space<vmem>>, vector<128x128xbf16>,
    return
  }
  func.func @transform_0(%arg0: i32) -> (i32, i32) {
    %c0_i32 = arith.constant 0 : i32
    %c0_i32_0 = arith.constant 0 : i32
    return %arg0, %c0_i32 : i32, i32
  }
  func.func @transform_1(%arg0: i32) -> (i32, i32) {
    %c0_i32 = arith.constant 0 : i32
    %c0_i32_0 = arith.constant 0 : i32
    %c0_i32_1 = arith.constant 0 : i32
    return %c0_i32, %c0_i32_0 : i32, i32
  }
  func.func @transform_2(%arg0: i32) -> (i32, i32) {
    %c0_i32 = arith.constant 0 : i32
    %c0_i32_0 = arith.constant 0 : i32
    return %arg0, %c0_i32 : i32, i32
  }
}

</mosaic_0001>

<llo_original>
// kernel: tpu_custom_call.1
$region0: #{tpu_custom_call.1}
  #allocation0 [shape = 'u32[]', space=smem, size = 0x4, offset = 0x4, fixed_abs, tag = 'smem constant byte address 0x4 - core index']
  #allocation1 [shape = 'u32[144,128]{1,0:T(1,128)}', space=vmem, size = 0x12000, scoped, tag = 'internal scratch']
  %s0 = inlined_call_operand.hbm [shape: bf16[128,128], index: 0, kind: input, shape index: {}]
  %s1 = inlined_call_operand.hbm [shape: bf16[128,128], index: 1, kind: input, shape index: {}]
  %s2 = inlined_call_operand.hbm [shape: bf16[128,128], index: 2, kind: output, shape index: {}]
  %s3 = sld [smem:[#allocation0]]
  $region26: #{tpu_custom_call.1} parent=0
    _
  %s5 = ssub.s32 1, %s3
  %s6 = scalar_select 0, %s5, %s3
  $region1: #{tpu_custom_call.1} parent=0
    #allocation2 [shape = 'u8[32768]{0}', space=vmem, size = 0x8000, scoped, tag = 'input window, operand 0, single buffered']
    #allocation3 [shape = 's32[1]{0}', space=sflag, size = 0x4, scoped, tag = 'scoped memory for tpu_custom_call.1']
    #allocation4 [shape = 's32[1]{0}', space=sflag, size = 0x4, scoped, tag = 'scoped memory for tpu_custom_call.1']
    #allocation5 [shape = 'u8[32768]{0}', space=vmem, size = 0x8000, scoped, tag = 'input window, operand 1, single buffered']
    #allocation6 [shape = 's32[1]{0}', space=sflag, size = 0x4, scoped, tag = 'scoped memory for tpu_custom_call.1']
    #allocation7 [shape = 'u8[32768]{0}', space=vmem, size = 0x8000, scoped, tag = 'output window, operand 0, single buffered']
    %7 = vsyncpa [#allocation3], 0
    %8 = vsyncpa [#allocation6], 0
    %9 = vsyncpa [#allocation4], 0
    // Predicated region
    $region2: #{tpu_custom_call.1} parent=1 // pred_check
      _
    $region3: #{tpu_custom_call.1} parent=1 // pred_check_branch
      %11 = sbr.rel (0) target = $region5
    $region4: #{tpu_custom_call.1} parent=1 // pred_region
      %s13 = ssub.s32 1024, 1024
      %14 = vsyncadd [#allocation3], %s13
      %s15 = sshll.u32 [#allocation2], 4
      %s16 = int_to_ptr.vmem [resolvable:$true] %s15
      %21 = dma.hbm_to_vmem [thread:$0]  %s0, 1024, %s16, [#allocation3], 64, 64, 4
    $region5: #{tpu_custom_call.1} parent=1 // pred_fallthru
      _
    // Predicated region
    $region6: #{tpu_custom_call.1} parent=1 // pred_check
      _
    $region7: #{tpu_custom_call.1} parent=1 // pred_check_branch
      %23 = sbr.rel (0) target = $region9
    $region8: #{tpu_custom_call.1} parent=1 // pred_region
      %s25 = ssub.s32 1024, 1024
      %26 = vsyncadd [#allocation6], %s25
      %s27 = sshll.u32 [#allocation5], 4
      %s28 = int_to_ptr.vmem [resolvable:$true] %s27
      %33 = dma.hbm_to_vmem [thread:$0]  %s1, 1024, %s28, [#allocation6], 64, 64, 4
    $region9: #{tpu_custom_call.1} parent=1 // pred_fallthru
      _
    // Predicated region
    $region10: #{tpu_custom_call.1} parent=1 // pred_check
      _
    $region11: #{tpu_custom_call.1} parent=1 // pred_check_branch
      %35 = sbr.rel (0) target = $region13
    $region12: #{tpu_custom_call.1} parent=1 // pred_region
      %36 = dma.done [#allocation3], 1024
    $region13: #{tpu_custom_call.1} parent=1 // pred_fallthru
      _
    // Predicated region
    $region14: #{tpu_custom_call.1} parent=1 // pred_check
      _
    $region15: #{tpu_custom_call.1} parent=1 // pred_check_branch
      %38 = sbr.rel (0) target = $region17
    $region16: #{tpu_custom_call.1} parent=1 // pred_region
      %39 = dma.done [#allocation6], 1024
    $region17: #{tpu_custom_call.1} parent=1 // pred_fallthru
      _
    %v41 = vld [vmem:[#allocation2] sm:$0xf]
    %v42 = vld [vmem:[#allocation2 + $0x4] sm:$0xf]
    %v43 = vld [vmem:[#allocation2 + $0x8] sm:$0xf]
    %v44 = vld [vmem:[#allocation2 + $0xc] sm:$0xf]
    %v45 = vld [vmem:[#allocation2 + $0x10] sm:$0xf]
    %v46 = vld [vmem:[#allocation2 + $0x14] sm:$0xf]
    %v47 = vld [vmem:[#allocation2 + $0x18] sm:$0xf]
    %v48 = vld [vmem:[#allocation2 + $0x1c] sm:$0xf]
    %v49 = vld [vmem:[#allocation2 + $0x20] sm:$0xf]
    %v50 = vld [vmem:[#allocation2 + $0x24] sm:$0xf]
    %v51 = vld [vmem:[#allocation2 + $0x28] sm:$0xf]
    %v52 = vld [vmem:[#allocation2 + $0x2c] sm:$0xf]
    %v53 = vld [vmem:[#allocation2 + $0x30] sm:$0xf]
    %v54 = vld [vmem:[#allocation2 + $0x34] sm:$0xf]
    %v55 = vld [vmem:[#allocation2 + $0x38] sm:$0xf]
    %v56 = vld [vmem:[#allocation2 + $0x3c] sm:$0xf]
    %v57 = vld [vmem:[#allocation5] sm:$0xf]
    %v58 = vld [vmem:[#allocation5 + $0x4] sm:$0xf]
    %v59 = vld [vmem:[#allocation5 + $0x8] sm:$0xf]
    %v60 = vld [vmem:[#allocation5 + $0xc] sm:$0xf]
    %v61 = vld [vmem:[#allocation5 + $0x10] sm:$0xf]
    %v62 = vld [vmem:[#allocation5 + $0x14] sm:$0xf]
    %v63 = vld [vmem:[#allocation5 + $0x18] sm:$0xf]
    %v64 = vld [vmem:[#allocation5 + $0x1c] sm:$0xf]
    %v65 = vld [vmem:[#allocation5 + $0x20] sm:$0xf]
    %v66 = vld [vmem:[#allocation5 + $0x24] sm:$0xf]
    %v67 = vld [vmem:[#allocation5 + $0x28] sm:$0xf]
    %v68 = vld [vmem:[#allocation5 + $0x2c] sm:$0xf]
    %v69 = vld [vmem:[#allocation5 + $0x30] sm:$0xf]
    %v70 = vld [vmem:[#allocation5 + $0x34] sm:$0xf]
    %v71 = vld [vmem:[#allocation5 + $0x38] sm:$0xf]
    %v72 = vld [vmem:[#allocation5 + $0x3c] sm:$0xf]
    %v89 = vunpack.c.l.b16 %v41
    %v90 = vunpack.c.l.b16 %v42
    %v91 = vunpack.c.l.b16 %v43
    %v92 = vunpack.c.l.b16 %v44
    %v93 = vunpack.c.l.b16 %v45
    %v94 = vunpack.c.l.b16 %v46
    %v95 = vunpack.c.l.b16 %v47
    %v96 = vunpack.c.l.b16 %v48
    %v97 = vunpack.c.l.b16 %v49
    %v98 = vunpack.c.l.b16 %v50
    %v99 = vunpack.c.l.b16 %v51
    %v100 = vunpack.c.l.b16 %v52
    %v101 = vunpack.c.l.b16 %v53
    %v102 = vunpack.c.l.b16 %v54
    %v103 = vunpack.c.l.b16 %v55
    %v104 = vunpack.c.l.b16 %v56
    %v105 = vpack.c.b16 %v90, %v89
    %v106 = vpack.c.b16 %v92, %v91
    %v107 = vpack.c.b16 %v94, %v93
    %v108 = vpack.c.b16 %v96, %v95
    %v109 = vpack.c.b16 %v98, %v97
    %v110 = vpack.c.b16 %v100, %v99
    %v111 = vpack.c.b16 %v102, %v101
    %v112 = vpack.c.b16 %v104, %v103
    %v137 = vunpack.c.l.b16 %v57
    %v138 = vunpack.c.l.b16 %v58
    %v139 = vunpack.c.l.b16 %v59
    %v140 = vunpack.c.l.b16 %v60
    %v141 = vunpack.c.l.b16 %v61
    %v142 = vunpack.c.l.b16 %v62
    %v143 = vunpack.c.l.b16 %v63
    %v144 = vunpack.c.l.b16 %v64
    %v145 = vunpack.c.l.b16 %v65
    %v146 = vunpack.c.l.b16 %v66
    %v147 = vunpack.c.l.b16 %v67
    %v148 = vunpack.c.l.b16 %v68
    %v149 = vunpack.c.l.b16 %v69
    %v150 = vunpack.c.l.b16 %v70
    %v151 = vunpack.c.l.b16 %v71
    %v152 = vunpack.c.l.b16 %v72
    %v153 = vpack.c.b16 %v138, %v137
    %v154 = vpack.c.b16 %v140, %v139
    %v155 = vpack.c.b16 %v142, %v141
    %v156 = vpack.c.b16 %v144, %v143
    %v157 = vpack.c.b16 %v146, %v145
    %v158 = vpack.c.b16 %v148, %v147
    %v159 = vpack.c.b16 %v150, %v149
    %v160 = vpack.c.b16 %v152, %v151
    %169 = vmatprep.subr.bf16.mxu0 0
    %170 = vmatpush1.bf16.msra.mxu0 %v153
    %171 = vmatprep.subr.bf16.mxu0 0
    %172 = vmatpush1.bf16.msra.mxu0 %v154
    %173 = vmatprep.subr.bf16.mxu0 0
    %174 = vmatpush1.bf16.msra.mxu0 %v155
    %175 = vmatprep.subr.bf16.mxu0 0
    %176 = vmatpush1.bf16.msra.mxu0 %v156
    %177 = vmatprep.subr.bf16.mxu0 0
    %178 = vmatpush1.bf16.msra.mxu0 %v157
    %179 = vmatprep.subr.bf16.mxu0 0
    %180 = vmatpush1.bf16.msra.mxu0 %v158
    %181 = vmatprep.subr.bf16.mxu0 0
    %182 = vmatpush1.bf16.msra.mxu0 %v159
    %183 = vmatprep.subr.bf16.mxu0 0
    %184 = vmatpush1.bf16.msra.mxu0 %v160
    %185 = vmatprep.subr.bf16.mxu0 0
    %186 = vmatpush1.bf16.msra.mxu0 0
    %187 = vmatprep.subr.bf16.mxu0 0
    %188 = vmatpush1.bf16.msra.mxu0 0
    %189 = vmatprep.subr.bf16.mxu0 0
    %190 = vmatpush1.bf16.msra.mxu0 0
    %191 = vmatprep.subr.bf16.mxu0 0
    %192 = vmatpush1.bf16.msra.mxu0 0
    %193 = vmatprep.subr.bf16.mxu0 0
    %194 = vmatpush1.bf16.msra.mxu0 0
    %195 = vmatprep.subr.bf16.mxu0 0
    %196 = vmatpush1.bf16.msra.mxu0 0
    %197 = vmatprep.subr.bf16.mxu0 0
    %198 = vmatpush1.bf16.msra.mxu0 0
    %199 = vmatprep.subr.bf16.mxu0 0
    %200 = vmatpush1.bf16.msra.mxu0 0
    %201 = vmatprep.mubr.bf16.mxu0 0
    %202 = vmatmul.mubr.bf16.gmra.mrb[0].mxu0 %v105
    %v203 = vpop.f32.mrb[0].mxu0
    %v204 = vadd.f32 0.0, %v203
    %v205 = vpop.f32.mrb[0].mxu0
    %v206 = vpop.f32.mrb[0].mxu0
    %v207 = vadd.f32 0.0, %v206
    %v208 = vpop.f32.mrb[0].mxu0
    %209 = vmatprep.mubr.bf16.mxu0 0
    %210 = vmatmul.mubr.bf16.gmra.mrb[0].mxu0 %v106
    %v211 = vpop.f32.mrb[0].mxu0
    %v212 = vadd.f32 0.0, %v211
    %v213 = vpop.f32.mrb[0].mxu0
    %v214 = vpop.f32.mrb[0].mxu0
    %v215 = vadd.f32 0.0, %v214
    %v216 = vpop.f32.mrb[0].mxu0
    %217 = vmatprep.mubr.bf16.mxu0 0
    %218 = vmatmul.mubr.bf16.gmra.mrb[0].mxu0 %v107
    %v219 = vpop.f32.mrb[0].mxu0
    %v220 = vadd.f32 0.0, %v219
    %v221 = vpop.f32.mrb[0].mxu0
    %v222 = vpop.f32.mrb[0].mxu0
    %v223 = vadd.f32 0.0, %v222
    %v224 = vpop.f32.mrb[0].mxu0
    %225 = vmatprep.mubr.bf16.mxu0 0
    %226 = vmatmul.mubr.bf16.gmra.mrb[0].mxu0 %v108
    %v227 = vpop.f32.mrb[0].mxu0
    %v228 = vadd.f32 0.0, %v227
    %v229 = vpop.f32.mrb[0].mxu0
    %v230 = vpop.f32.mrb[0].mxu0
    %v231 = vadd.f32 0.0, %v230
    %v232 = vpop.f32.mrb[0].mxu0
    %233 = vmatprep.mubr.bf16.mxu0 0
    %234 = vmatmul.mubr.bf16.gmra.mrb[0].mxu0 %v109
    %v235 = vpop.f32.mrb[0].mxu0
    %v236 = vadd.f32 0.0, %v235
    %v237 = vpop.f32.mrb[0].mxu0
    %v238 = vpop.f32.mrb[0].mxu0
    %v239 = vadd.f32 0.0, %v238
    %v240 = vpop.f32.mrb[0].mxu0
    %241 = vmatprep.mubr.bf16.mxu0 0
    %242 = vmatmul.mubr.bf16.gmra.mrb[0].mxu0 %v110
    %v243 = vpop.f32.mrb[0].mxu0
    %v244 = vadd.f32 0.0, %v243
    %v245 = vpop.f32.mrb[0].mxu0
    %v246 = vpop.f32.mrb[0].mxu0
    %v247 = vadd.f32 0.0, %v246
    %v248 = vpop.f32.mrb[0].mxu0
    %249 = vmatprep.mubr.bf16.mxu0 0
    %250 = vmatmul.mubr.bf16.gmra.mrb[0].mxu0 %v111
    %v251 = vpop.f32.mrb[0].mxu0
    %v252 = vadd.f32 0.0, %v251
    %v253 = vpop.f32.mrb[0].mxu0
    %v254 = vpop.f32.mrb[0].mxu0
    %v255 = vadd.f32 0.0, %v254
    %v256 = vpop.f32.mrb[0].mxu0
    %257 = vmatprep.mubr.bf16.mxu0 0
    %258 = vmatmul.mubr.bf16.gmra.mrb[0].mxu0 %v112
    %v259 = vpop.f32.mrb[0].mxu0
    %v260 = vadd.f32 0.0, %v259
    %v261 = vpop.f32.mrb[0].mxu0
    %v262 = vpop.f32.mrb[0].mxu0
    %v263 = vadd.f32 0.0, %v262
    %v264 = vpop.f32.mrb[0].mxu0
    %265 = vdwg.mxu0
    %v266 = vpack.c.bf16 %v207, %v204
    %v267 = vpack.c.bf16 %v215, %v212
    %v268 = vpack.c.bf16 %v223, %v220
    %v269 = vpack.c.bf16 %v231, %v228
    %v270 = vpack.c.bf16 %v239, %v236
    %v271 = vpack.c.bf16 %v247, %v244
    %v272 = vpack.c.bf16 %v255, %v252
    %v273 = vpack.c.bf16 %v263, %v260
    %v282 = vunpack.c.l.b16 %v266
    %v283 = vunpack.c.h.b16 %v266
    %v284 = vunpack.c.l.b16 %v267
    %v285 = vunpack.c.h.b16 %v267
    %v286 = vunpack.c.l.b16 %v268
    %v287 = vunpack.c.h.b16 %v268
    %v288 = vunpack.c.l.b16 %v269
    %v289 = vunpack.c.h.b16 %v269
    %v290 = vunpack.c.l.b16 %v270
    %v291 = vunpack.c.h.b16 %v270
    %v292 = vunpack.c.l.b16 %v271
    %v293 = vunpack.c.h.b16 %v271
    %v294 = vunpack.c.l.b16 %v272
    %v295 = vunpack.c.h.b16 %v272
    %v296 = vunpack.c.l.b16 %v273
    %v297 = vunpack.c.h.b16 %v273
    %v298 = vpack.c.b16 %v282, %v282
    %v299 = vpack.c.b16 %v283, %v283
    %v300 = vpack.c.b16 %v284, %v284
    %v301 = vpack.c.b16 %v285, %v285
    %v302 = vpack.c.b16 %v286, %v286
    %v303 = vpack.c.b16 %v287, %v287
    %v304 = vpack.c.b16 %v288, %v288
    %v305 = vpack.c.b16 %v289, %v289
    %v306 = vpack.c.b16 %v290, %v290
    %v307 = vpack.c.b16 %v291, %v291
    %v308 = vpack.c.b16 %v292, %v292
    %v309 = vpack.c.b16 %v293, %v293
    %v310 = vpack.c.b16 %v294, %v294
    %v311 = vpack.c.b16 %v295, %v295
    %v312 = vpack.c.b16 %v296, %v296
    %v313 = vpack.c.b16 %v297, %v297
    %330 = vst [vmem:[#allocation7] sm:$0xf] %v298
    %331 = vst [vmem:[#allocation7 + $0x4] sm:$0xf] %v299
    %332 = vst [vmem:[#allocation7 + $0x8] sm:$0xf] %v300
    %333 = vst [vmem:[#allocation7 + $0xc] sm:$0xf] %v301
    %334 = vst [vmem:[#allocation7 + $0x10] sm:$0xf] %v302
    %335 = vst [vmem:[#allocation7 + $0x14] sm:$0xf] %v303
    %336 = vst [vmem:[#allocation7 + $0x18] sm:$0xf] %v304
    %337 = vst [vmem:[#allocation7 + $0x1c] sm:$0xf] %v305
    %338 = vst [vmem:[#allocation7 + $0x20] sm:$0xf] %v306
    %339 = vst [vmem:[#allocation7 + $0x24] sm:$0xf] %v307
    %340 = vst [vmem:[#allocation7 + $0x28] sm:$0xf] %v308
    %341 = vst [vmem:[#allocation7 + $0x2c] sm:$0xf] %v309
    %342 = vst [vmem:[#allocation7 + $0x30] sm:$0xf] %v310
    %343 = vst [vmem:[#allocation7 + $0x34] sm:$0xf] %v311
    %344 = vst [vmem:[#allocation7 + $0x38] sm:$0xf] %v312
    %345 = vst [vmem:[#allocation7 + $0x3c] sm:$0xf] %v313
    // Predicated region
    $region18: #{tpu_custom_call.1} parent=1 // pred_check
      _
    $region19: #{tpu_custom_call.1} parent=1 // pred_check_branch
      %347 = sbr.rel (0) target = $region21
    $region20: #{tpu_custom_call.1} parent=1 // pred_region
      %s349 = ssub.s32 1024, 1024
      %350 = vsyncadd [#allocation4], %s349
      %s351 = sshll.u32 [#allocation7], 4
      %s352 = int_to_ptr.vmem [resolvable:$true] %s351
      %357 = dma.vmem_to_hbm [thread:$0]  %s352, 1024, %s2, [#allocation4], 64, 64, 4
    $region21: #{tpu_custom_call.1} parent=1 // pred_fallthru
      _
    // Predicated region
    $region22: #{tpu_custom_call.1} parent=1 // pred_check
      _
    $region23: #{tpu_custom_call.1} parent=1 // pred_check_branch
      %359 = sbr.rel (0) target = $region25
    $region24: #{tpu_custom_call.1} parent=1 // pred_region
      %360 = dma.done [#allocation4], 1024
    $region25: #{tpu_custom_call.1} parent=1 // pred_fallthru
      _
    %361 = vsyncpa [#allocation3], 1
    %362 = vsyncpa [#allocation6], 1
    %363 = vsyncpa [#allocation4], 1

</llo_original>
